<compile_context>
chip_gen: v6e
topology: v6e:2x2x1
jax: 0.10.0
libtpu: 0.0.40
codegen_flags: <defaults>
</compile_context>

<pallas_src>
import functools
import math

import jax
import jax.numpy as jnp
from jax import lax
from jax.experimental import pallas as pl
from jax.experimental.pallas import tpu as pltpu


def _vmem_limit_bytes():
    # Generation-aware VMEM scope: ~3/4 of physical capacity, capped at 96 MiB.
    #   v5e/v6e (128 MiB physical) -> 96 MiB;  v7x (64 MiB physical) -> 48 MiB.
    try:
        cap = pltpu.get_tpu_info().vmem_capacity_bytes
    except Exception:
        cap = 64 * 1024 * 1024  # conservative fallback (v7x-sized)
    return min(int(cap * 3 // 4), 96 * 1024 * 1024)


_VMEM_LIMIT = _vmem_limit_bytes()


# ---------------------------------------------------------------------------
# Projection kernels (Linear / fused multi-Linear)
# ---------------------------------------------------------------------------

def _linear_kernel(x_ref, w_ref, o_ref):
    o_ref[...] = jnp.dot(
        x_ref[...], w_ref[...], preferred_element_type=jnp.float32
    ).astype(o_ref.dtype)


def _linear_bias_kernel(x_ref, w_ref, b_ref, o_ref):
    acc = jnp.dot(x_ref[...], w_ref[...], preferred_element_type=jnp.float32)
    o_ref[...] = (acc + b_ref[...].astype(jnp.float32)).astype(o_ref.dtype)


def _fused_proj_kernel(*refs):
    # refs = (x_ref, w_ref_0..w_ref_{n-1}, o_ref_0..o_ref_{n-1})
    n = (len(refs) - 1) // 2
    x_ref = refs[0]
    w_refs = refs[1:1 + n]
    o_refs = refs[1 + n:]
    x = x_ref[...]  # load x once, reuse for every projection
    for w_ref, o_ref in zip(w_refs, o_refs):
        o_ref[...] = jnp.dot(
            x, w_ref[...], preferred_element_type=jnp.float32
        ).astype(o_ref.dtype)


def pallas_linear(x2d, w, b=None, *, tm=1024, tn=512):
    """x2d: (R, K) @ w: (K, N) [+ b: (N,)] -> (R, N), tiled over (rows, cols).

    tm=1024 keeps the weight-block re-fetch traffic (R/tm)*K*N*4 low on v5e.
    """
    R, K = x2d.shape
    K2, N = w.shape
    assert K == K2
    tm = min(tm, R)
    tn = min(tn, N)
    grid = (pl.cdiv(R, tm), pl.cdiv(N, tn))

    in_specs = [
        pl.BlockSpec((tm, K), lambda i, j: (i, 0)),
        # TODO(synk): add pipeline_mode=pl.Buffered(3) on the weight spec if a
        # profile shows exposed DMA on v5e (weight block changes every j step).
        pl.BlockSpec((K, tn), lambda i, j: (0, j)),
    ]
    args = (x2d, w)
    kernel = _linear_kernel
    if b is not None:
        in_specs.append(pl.BlockSpec((1, tn), lambda i, j: (0, j)))
        args = (x2d, w, b.reshape(1, N))
        kernel = _linear_bias_kernel

    # TODO(synk): add a K grid axis ("arbitrary") with a VMEM f32 accumulator
    # if K ever gets large enough that a (tm, K) block stresses VMEM.
    return pl.pallas_call(
        kernel,
        out_shape=jax.ShapeDtypeStruct((R, N), x2d.dtype),
        grid_spec=pltpu.PrefetchScalarGridSpec(
            num_scalar_prefetch=0,
            grid=grid,
            in_specs=in_specs,
            out_specs=pl.BlockSpec((tm, tn), lambda i, j: (i, j)),
        ),
        compiler_params=pltpu.CompilerParams(
            dimension_semantics=("parallel", "parallel"),
            vmem_limit_bytes=_VMEM_LIMIT,
        ),
    )(*args)


def pallas_fused_proj(x2d, weights, *, tm=1024, tn=512):
    """Fused multi-projection: x2d (R, K) against several (K, N) weights.

    Reads x once per tile and produces one (R, N) output per weight (all
    weights share N).  Used for fused K|V (cross-attn) and Q|K|V (self-attn).
    """
    R, K = x2d.shape
    N = weights[0].shape[1]
    for w in weights:
        assert w.shape == (K, N)
    tm = min(tm, R)
    tn = min(tn, N)
    grid = (pl.cdiv(R, tm), pl.cdiv(N, tn))

    in_specs = [pl.BlockSpec((tm, K), lambda i, j: (i, 0))]
    in_specs += [pl.BlockSpec((K, tn), lambda i, j: (0, j)) for _ in weights]
    out_specs = [pl.BlockSpec((tm, tn), lambda i, j: (i, j)) for _ in weights]
    out_shape = tuple(
        jax.ShapeDtypeStruct((R, N), x2d.dtype) for _ in weights
    )
    return pl.pallas_call(
        _fused_proj_kernel,
        out_shape=out_shape,
        grid_spec=pltpu.PrefetchScalarGridSpec(
            num_scalar_prefetch=0,
            grid=grid,
            in_specs=in_specs,
            out_specs=out_specs,
        ),
        compiler_params=pltpu.CompilerParams(
            dimension_semantics=("parallel", "parallel"),
            vmem_limit_bytes=_VMEM_LIMIT,
        ),
    )(x2d, *weights)


# ---------------------------------------------------------------------------
# Flash attention kernel (online softmax, q/kv tiled)
# ---------------------------------------------------------------------------

def _flash_attn_kernel(q_ref, k_ref, v_ref, o_ref, m_sc, l_sc, acc_sc, *,
                       hpb, dim_head, mxu_dtype):
    # q_ref: (1, tq, hpb*d)   k/v_ref: (1, tkv, hpb*d)   o_ref: (1, tq, hpb*d)
    # Scratch: m_sc/l_sc (hpb, tq, 1) f32; acc_sc (hpb, tq, d) f32.
    # The 1/sqrt(d) scale is folded into the q projection weights.
    kv = pl.program_id(3)

    @pl.when(kv == 0)
    def _init():
        m_sc[...] = jnp.full(m_sc.shape, -jnp.inf, m_sc.dtype)
        l_sc[...] = jnp.zeros(l_sc.shape, l_sc.dtype)
        acc_sc[...] = jnp.zeros(acc_sc.shape, acc_sc.dtype)

    for h in range(hpb):
        lo, hi = h * dim_head, (h + 1) * dim_head
        q = q_ref[0, :, lo:hi]
        k = k_ref[0, :, lo:hi]
        v = v_ref[0, :, lo:hi]
        if mxu_dtype is not None:
            q = q.astype(mxu_dtype)
            k = k.astype(mxu_dtype)
            v = v.astype(mxu_dtype)
        # s = einsum('i d, j d -> i j', q, k): contract last dims, no k.T.
        s = lax.dot_general(
            q, k, (((1,), (1,)), ((), ())), preferred_element_type=jnp.float32
        )
        m_prev = m_sc[h]                                       # (tq, 1) f32
        m_new = jnp.maximum(m_prev, jnp.max(s, axis=-1, keepdims=True))
        alpha = jnp.exp(m_prev - m_new)
        p = jnp.exp(s - m_new)                                 # unnormalized
        l_sc[h] = alpha * l_sc[h] + jnp.sum(p, axis=-1, keepdims=True)
        # Deferred normalization: PV on unnormalized p, rescale at flush.
        acc_sc[h] = alpha * acc_sc[h] + jnp.dot(
            p.astype(v.dtype), v, preferred_element_type=jnp.float32
        )
        m_sc[h] = m_new

    @pl.when(kv == pl.num_programs(3) - 1)
    def _flush():
        for h in range(hpb):
            lo, hi = h * dim_head, (h + 1) * dim_head
            inv_l = pl.reciprocal(l_sc[h], approx=True)        # EUP, ~free slot
            # Per-head direct store (no lane concat); the output block itself
            # stays lane-dense (hpb*d lanes) for the HBM writeback.
            o_ref[0, :, lo:hi] = (acc_sc[h] * inv_l).astype(o_ref.dtype)


def _choose_heads_per_block(heads, dim_head, target_lanes=256):
    """Smallest head group whose lane width is a multiple of 128, grown toward
    target_lanes (256 -> hpb=2-4 for d=64).  Falls back to all heads (full lane
    dim) for small configs."""
    base = 128 // math.gcd(dim_head, 128)
    if base > heads or heads % base != 0:
        return heads
    hpb = base
    while (hpb * 2 <= heads and heads % (hpb * 2) == 0
           and hpb * 2 * dim_head <= target_lanes):
        hpb *= 2
    return hpb


def _choose_seq_tile(n, target):
    """Largest power-of-two-ish divisor of n that is <= target; full n if no
    clean divisor (keeps softmax free of padded-KV garbage)."""
    if n <= target:
        return n
    t = target
    while t >= 8 and n % t != 0:
        t //= 2
    return t if (t >= 8 and n % t == 0) else n


def pallas_attention(q, k, v, heads, dim_head, *, tq=256, tkv=512,
                     mxu_dtype=None):
    """q: (B, N, h*d), k/v: (B, M, h*d) -> (B, N, h*d).

    Flash-style grid: (batch, head-group, q-tile, kv-tile) with the KV axis as
    the reduction ("arbitrary"); running (m, l, acc) live in f32 VMEM scratch.
    Head selection happens in the index_map (lane-dense blocks of hpb heads),
    so no transposes are needed on either side of this kernel.
    """
    B, N, inner = q.shape
    M = k.shape[1]
    assert inner == heads * dim_head
    hpb = _choose_heads_per_block(heads, dim_head)
    lanes = hpb * dim_head
    tq = _choose_seq_tile(N, tq)
    tkv = _choose_seq_tile(M, tkv)
    grid = (B, heads // hpb, N // tq, M // tkv)

    kernel = functools.partial(
        _flash_attn_kernel, hpb=hpb, dim_head=dim_head, mxu_dtype=mxu_dtype
    )
    return pl.pallas_call(
        kernel,
        out_shape=jax.ShapeDtypeStruct((B, N, inner), q.dtype),
        grid_spec=pltpu.PrefetchScalarGridSpec(
            num_scalar_prefetch=0,
            grid=grid,
            in_specs=[
                pl.BlockSpec((1, tq, lanes), lambda b, g, i, j: (b, i, g)),
                pl.BlockSpec((1, tkv, lanes), lambda b, g, i, j: (b, j, g)),
                pl.BlockSpec((1, tkv, lanes), lambda b, g, i, j: (b, j, g)),
            ],
            # Output block index constant across the KV axis -> resident
            # accumulator; written once at the final KV step.
            out_specs=pl.BlockSpec((1, tq, lanes), lambda b, g, i, j: (b, i, g)),
            scratch_shapes=[
                pltpu.VMEM((hpb, tq, 1), jnp.float32),         # running max
                pltpu.VMEM((hpb, tq, 1), jnp.float32),         # running sum
                pltpu.VMEM((hpb, tq, dim_head), jnp.float32),  # running PV acc
            ],
        ),
        compiler_params=pltpu.CompilerParams(
            dimension_semantics=("parallel", "parallel", "parallel",
                                 "arbitrary"),
            vmem_limit_bytes=_VMEM_LIMIT,
        ),
    )(q, k, v)


# ---------------------------------------------------------------------------
# CrossAttention module (forward only, eval mode: dropout is identity)
# ---------------------------------------------------------------------------

class CrossAttentionPallas:
    def __init__(self, query_dim, context_dim=None, heads=8, dim_head=64,
                 dropout=0.0, rel_pe=False, *, key, attn_compute_dtype=None):
        inner_dim = dim_head * heads
        context_dim = query_dim if context_dim is None else context_dim
        self.scale = dim_head ** (-0.5)
        self.heads = heads
        self.dim_head = dim_head
        self.rel_pe = rel_pe
        # On v6e/v7x set attn_compute_dtype=jnp.bfloat16 for the MXU matmuls
        # (softmax stats and accumulation stay f32).  Default None keeps the
        # input dtype so the f32 reference comparison stays tight.
        self.attn_compute_dtype = attn_compute_dtype

        k1, k2, k3, k4 = jax.random.split(key, 4)

        def init_w(k, fan_in, fan_out):
            bound = 1.0 / math.sqrt(fan_in)
            return jax.random.uniform(
                k, (fan_in, fan_out), jnp.float32, -bound, bound
            )

        self.w_q = init_w(k1, query_dim, inner_dim)
        self.w_k = init_w(k2, context_dim, inner_dim)
        self.w_v = init_w(k3, context_dim, inner_dim)
        self.w_out = init_w(k4, inner_dim, query_dim)
        self.b_out = jnp.zeros((query_dim,), jnp.float32)
        # Fold the 1/sqrt(d) attention scale into the q projection weights.
        self.w_q_scaled = self.w_q * self.scale
        if rel_pe:
            self.rel_bias = jnp.zeros((heads, 4, 4), jnp.float32)

    def __call__(self, x, context=None, mask=None):
        # TODO(synk): mask path (masked_fill with -finfo.max) not implemented;
        # the reference config does not pass a mask.
        assert mask is None
        B, N, Dq = x.shape
        h, d = self.heads, self.dim_head
        inner = h * d

        x2d = x.reshape(B * N, Dq)
        if context is None:
            # Self-attention: fused Q|K|V projection (x read once from HBM).
            M = N
            q2d, k2d, v2d = pallas_fused_proj(
                x2d, [self.w_q_scaled, self.w_k, self.w_v]
            )
        else:
            Bm, M, Dc = context.shape
            ctx2d = context.reshape(B * M, Dc)
            q2d = pallas_linear(x2d, self.w_q_scaled)
            # Cross-attention: fused K|V projection (context read once).
            k2d, v2d = pallas_fused_proj(ctx2d, [self.w_k, self.w_v])

        # Keep (B, seq, h*d) layout: head selection is done by BlockSpec
        # index_maps inside the attention kernel (no transposes).
        q = q2d.reshape(B, N, inner)
        k = k2d.reshape(B, M, inner)
        v = v2d.reshape(B, M, inner)

        out = pallas_attention(
            q, k, v, h, d, mxu_dtype=self.attn_compute_dtype
        )  # (B, N, inner)
        if self.rel_pe:
            # TODO(synk): rel_pe bias-add inside the attention kernel; the
            # default config (rel_pe=False) does not exercise this branch.
            pass

        # to_out: Linear(inner, query_dim) + Dropout (identity in eval)
        out = pallas_linear(out.reshape(B * N, inner), self.w_out, self.b_out)
        return out.reshape(B, N, Dq)


# ---------------------------------------------------------------------------
# Pure-JAX reference for a quick sanity check
# ---------------------------------------------------------------------------

def reference_forward(mod, x, context=None):
    context = x if context is None else context
    B, N, _ = x.shape
    M = context.shape[1]
    h, d = mod.heads, mod.dim_head
    q = (x @ mod.w_q).reshape(B, N, h, d).transpose(0, 2, 1, 3)
    k = (context @ mod.w_k).reshape(B, M, h, d).transpose(0, 2, 1, 3)
    v = (context @ mod.w_v).reshape(B, M, h, d).transpose(0, 2, 1, 3)
    sim = jnp.einsum("bhid,bhjd->bhij", q, k) * mod.scale
    attn = jax.nn.softmax(sim, axis=-1)
    out = jnp.einsum("bhij,bhjd->bhid", attn, v)
    out = out.transpose(0, 2, 1, 3).reshape(B, N, h * d)
    return out @ mod.w_out + mod.b_out


if __name__ == "__main__":
    key = jax.random.PRNGKey(0)
    k_param, k_x, k_ctx = jax.random.split(key, 3)

    B, N, M = 2, 16, 8
    query_dim, context_dim = 32, 24
    heads, dim_head = 2, 16

    mod = CrossAttentionPallas(
        query_dim, context_dim=context_dim, heads=heads, dim_head=dim_head,
        key=k_param,
    )

    x = jax.random.normal(k_x, (B, N, query_dim), jnp.float32)
    context = jax.random.normal(k_ctx, (B, M, context_dim), jnp.float32)

    out = mod(x, context)
    out = jax.block_until_ready(out)

    ref = reference_forward(mod, x, context)
    assert out.shape == (B, N, query_dim)
    # Tolerance is loosened slightly vs a pure-f32 comparison because the
    # kernel uses pl.reciprocal(approx=True) in the softmax normalization
    # (EUP approx reciprocal, ~1e-3 relative).
    assert jnp.allclose(out, ref, atol=5e-3, rtol=5e-3), "mismatch vs reference"

    # Also exercise the self-attention (fused Q|K|V) path.
    mod_self = CrossAttentionPallas(
        query_dim, context_dim=None, heads=heads, dim_head=dim_head,
        key=k_param,
    )
    out_self = jax.block_until_ready(mod_self(x))
    ref_self = reference_forward(mod_self, x)
    assert jnp.allclose(out_self, ref_self, atol=5e-3, rtol=5e-3), \
        "self-attention mismatch vs reference"

    print("KERNEL_OK")
</pallas_src>

<mosaic_0001>
module attributes {stable_mosaic.version = 11 : i64} {
  func.func @_linear_kernel(%arg0: i32, %arg1: i32, %arg2: memref<32x32xf32, #tpu.memory_space<vmem>>, %arg3: memref<32x32xf32, #tpu.memory_space<vmem>>, %arg4: memref<32x32xf32, #tpu.memory_space<vmem>>) attributes {dimension_semantics = [#tpu.dimension_semantics<parallel>, #tpu.dimension_semantics<parallel>], iteration_bounds = array<i64: 1, 1>, scalar_prefetch = 0 : i64, scratch_operands = 0 : i64, tpu.core_type = #tpu.core_type<tc>, window_params = [{transform_indices = @transform_0, window_bounds = array<i64: 32, 32>}, {transform_indices = @transform_1, window_bounds = array<i64: 32, 32>}, {transform_indices = @transform_2, window_bounds = array<i64: 32, 32>}]} {
    %c0 = arith.constant 0 : index
    %c0_0 = arith.constant 0 : index
    %0 = vector.load %arg2[%c0, %c0_0] : memref<32x32xf32, #tpu.memory_space<vmem>>, vector<32x32xf32>
    %c0_1 = arith.constant 0 : index
    %c0_2 = arith.constant 0 : index
    %1 = vector.load %arg3[%c0_1, %c0_2] : memref<32x32xf32, #tpu.memory_space<vmem>>, vector<32x32xf32>
    %cst = arith.constant dense<0.000000e+00> : vector<32x32xf32>
    %2 = tpu.matmul %0, %1, %cst {dimension_numbers = #tpu.dot_dimension_numbers<[1], [0], [0], [1], [0, 0, 1, 1], [], []>} : vector<32x32xf32>, vector<32x32xf32>, vector<32x32xf32> -> vector<32x32xf32>
    %c0_3 = arith.constant 0 : index
    %c0_4 = arith.constant 0 : index
    %3 = vector.load %arg4[%c0_3, %c0_4] : memref<32x32xf32, #tpu.memory_space<vmem>>, vector<32x32xf32>
    tpu.vector_store %arg4[%c0_3, %c0_4], %2 {strides = array<i32>} : memref<32x32xf32, #tpu.memory_space<vmem>>, vector<32x32xf32>,
    return
  }
  func.func @transform_0(%arg0: i32, %arg1: i32) -> (i32, i32) {
    %c0_i32 = arith.constant 0 : i32
    %c0_i32_0 = arith.constant 0 : i32
    return %arg0, %c0_i32 : i32, i32
  }
  func.func @transform_1(%arg0: i32, %arg1: i32) -> (i32, i32) {
    %c0_i32 = arith.constant 0 : i32
    %c0_i32_0 = arith.constant 0 : i32
    return %c0_i32, %arg1 : i32, i32
  }
  func.func @transform_2(%arg0: i32, %arg1: i32) -> (i32, i32) {
    %c0_i32 = arith.constant 0 : i32
    return %arg0, %arg1 : i32, i32
  }
}

</mosaic_0001>

<llo_original>
// kernel: tpu_custom_call.1
$region0: #{tpu_custom_call.1}
  #allocation0 [shape = 'u32[]', space=smem, size = 0x4, offset = 0x4, fixed_abs, tag = 'smem constant byte address 0x4 - core index']
  #allocation1 [shape = 'u32[144,128]{1,0:T(1,128)}', space=vmem, size = 0x12000, scoped, tag = 'internal scratch']
  %s0 = inlined_call_operand.hbm [shape: f32[32,32], index: 0, kind: input, shape index: {}]
  %s1 = inlined_call_operand.hbm [shape: f32[32,32], index: 1, kind: input, shape index: {}]
  %s2 = inlined_call_operand.hbm [shape: f32[32,32], index: 2, kind: output, shape index: {}]
  %s3 = sld [smem:[#allocation0]]
  $region26: #{tpu_custom_call.1} parent=0
    _
  %s5 = ssub.s32 1, %s3
  %s6 = scalar_select 0, %s5, %s3
  $region1: #{tpu_custom_call.1} parent=0
    #allocation2 [shape = 'u8[16384]{0}', space=vmem, size = 0x4000, scoped, tag = 'input window, operand 0, single buffered']
    #allocation3 [shape = 's32[1]{0}', space=sflag, size = 0x4, scoped, tag = 'scoped memory for tpu_custom_call.1']
    #allocation4 [shape = 's32[1]{0}', space=sflag, size = 0x4, scoped, tag = 'scoped memory for tpu_custom_call.1']
    #allocation5 [shape = 'u8[16384]{0}', space=vmem, size = 0x4000, scoped, tag = 'input window, operand 1, single buffered']
    #allocation6 [shape = 's32[1]{0}', space=sflag, size = 0x4, scoped, tag = 'scoped memory for tpu_custom_call.1']
    #allocation7 [shape = 'u8[16384]{0}', space=vmem, size = 0x4000, scoped, tag = 'output window, operand 0, single buffered']
    %7 = vsyncpa [#allocation3], 0
    %8 = vsyncpa [#allocation6], 0
    %9 = vsyncpa [#allocation4], 0
    // Predicated region
    $region2: #{tpu_custom_call.1} parent=1 // pred_check
      _
    $region3: #{tpu_custom_call.1} parent=1 // pred_check_branch
      %11 = sbr.rel (0) target = $region5
    $region4: #{tpu_custom_call.1} parent=1 // pred_region
      %s13 = ssub.s32 512, 512
      %14 = vsyncadd [#allocation3], %s13
      %s15 = sshll.u32 [#allocation2], 4
      %s16 = int_to_ptr.vmem [resolvable:$true] %s15
      %21 = dma.hbm_to_vmem [thread:$0]  %s0, 512, %s16, [#allocation3], 128, 128, 8
    $region5: #{tpu_custom_call.1} parent=1 // pred_fallthru
      _
    // Predicated region
    $region6: #{tpu_custom_call.1} parent=1 // pred_check
      _
    $region7: #{tpu_custom_call.1} parent=1 // pred_check_branch
      %23 = sbr.rel (0) target = $region9
    $region8: #{tpu_custom_call.1} parent=1 // pred_region
      %s25 = ssub.s32 512, 512
      %26 = vsyncadd [#allocation6], %s25
      %s27 = sshll.u32 [#allocation5], 4
      %s28 = int_to_ptr.vmem [resolvable:$true] %s27
      %33 = dma.hbm_to_vmem [thread:$0]  %s1, 512, %s28, [#allocation6], 128, 128, 8
    $region9: #{tpu_custom_call.1} parent=1 // pred_fallthru
      _
    // Predicated region
    $region10: #{tpu_custom_call.1} parent=1 // pred_check
      _
    $region11: #{tpu_custom_call.1} parent=1 // pred_check_branch
      %35 = sbr.rel (0) target = $region13
    $region12: #{tpu_custom_call.1} parent=1 // pred_region
      %36 = dma.done [#allocation3], 512
    $region13: #{tpu_custom_call.1} parent=1 // pred_fallthru
      _
    // Predicated region
    $region14: #{tpu_custom_call.1} parent=1 // pred_check
      _
    $region15: #{tpu_custom_call.1} parent=1 // pred_check_branch
      %38 = sbr.rel (0) target = $region17
    $region16: #{tpu_custom_call.1} parent=1 // pred_region
      %39 = dma.done [#allocation6], 512
    $region17: #{tpu_custom_call.1} parent=1 // pred_fallthru
      _
    %v40 = vld [vmem:[#allocation2] sm:$0xff]
    %v41 = vld [vmem:[#allocation2 + $0x8] sm:$0xff]
    %v42 = vld [vmem:[#allocation2 + $0x10] sm:$0xff]
    %v43 = vld [vmem:[#allocation2 + $0x18] sm:$0xff]
    %v44 = vld [vmem:[#allocation5] sm:$0xff]
    %v45 = vld [vmem:[#allocation5 + $0x8] sm:$0xff]
    %v46 = vld [vmem:[#allocation5 + $0x10] sm:$0xff]
    %v47 = vld [vmem:[#allocation5 + $0x18] sm:$0xff]
    %vm48 = vcmask 261120
    %v50 = vsel %vm48, %v40, 0
    %v53 = vsel %vm48, %v41, 0
    %v56 = vsel %vm48, %v42, 0
    %v59 = vsel %vm48, %v43, 0
    %61 = vmatprep.subr.mxu0 0.0
    %62 = vmatpush1.msra.mxu0 0.0
    %63 = vmatprep.subr.mxu0 0.0
    %64 = vmatpush1.msra.mxu0 0.0
    %65 = vmatprep.subr.mxu0 0.0
    %66 = vmatpush1.msra.mxu0 0.0
    %67 = vmatprep.subr.mxu0 0.0
    %68 = vmatpush1.msra.mxu0 0.0
    %69 = vmatprep.subr.mxu0 0.0
    %70 = vmatpush1.msra.mxu0 0.0
    %71 = vmatprep.subr.mxu0 0.0
    %72 = vmatpush1.msra.mxu0 0.0
    %73 = vmatprep.subr.mxu0 0.0
    %74 = vmatpush1.msra.mxu0 0.0
    %75 = vmatprep.subr.mxu0 0.0
    %76 = vmatpush1.msra.mxu0 0.0
    %77 = vmatprep.subr.mxu0 0.0
    %78 = vmatpush1.msra.mxu0 0.0
    %79 = vmatprep.subr.mxu0 0.0
    %80 = vmatpush1.msra.mxu0 0.0
    %81 = vmatprep.subr.mxu0 0.0
    %82 = vmatpush1.msra.mxu0 0.0
    %83 = vmatprep.subr.mxu0 0.0
    %84 = vmatpush1.msra.mxu0 0.0
    %85 = vmatprep.subr.mxu0 0.0
    %86 = vmatpush1.msra.mxu0 %v47
    %87 = vmatprep.subr.mxu0 0.0
    %88 = vmatpush1.msra.mxu0 %v46
    %89 = vmatprep.subr.mxu0 0.0
    %90 = vmatpush1.msra.mxu0 %v45
    %91 = vmatprep.subr.mxu0 0.0
    %92 = vmatpush1.msra.mxu0 %v44
    %93 = vmatprep.subr.mxu0 0.0
    %94 = vmatpush2.msra.mxu0 0.0
    %95 = vmatprep.subr.mxu0 0.0
    %96 = vmatpush2.msra.mxu0 0.0
    %97 = vmatprep.subr.mxu0 0.0
    %98 = vmatpush2.msra.mxu0 0.0
    %99 = vmatprep.subr.mxu0 0.0
    %100 = vmatpush2.msra.mxu0 0.0
    %101 = vmatprep.subr.mxu0 0.0
    %102 = vmatpush2.msra.mxu0 0.0
    %103 = vmatprep.subr.mxu0 0.0
    %104 = vmatpush2.msra.mxu0 0.0
    %105 = vmatprep.subr.mxu0 0.0
    %106 = vmatpush2.msra.mxu0 0.0
    %107 = vmatprep.subr.mxu0 0.0
    %108 = vmatpush2.msra.mxu0 0.0
    %109 = vmatprep.subr.mxu0 0.0
    %110 = vmatpush2.msra.mxu0 0.0
    %111 = vmatprep.subr.mxu0 0.0
    %112 = vmatpush2.msra.mxu0 0.0
    %113 = vmatprep.subr.mxu0 0.0
    %114 = vmatpush2.msra.mxu0 0.0
    %115 = vmatprep.subr.mxu0 0.0
    %116 = vmatpush2.msra.mxu0 0.0
    %117 = vmatprep.subr.mxu0 0.0
    %118 = vmatpush2.msra.mxu0 0.0
    %119 = vmatprep.subr.mxu0 0.0
    %120 = vmatpush2.msra.mxu0 0.0
    %121 = vmatprep.subr.mxu0 0.0
    %122 = vmatpush2.msra.mxu0 0.0
    %123 = vmatprep.subr.mxu0 0.0
    %124 = vmatpush2.msra.mxu0 0.0
    %125 = vmatprep.mubr.f32.mxu0 0.0
    %126 = vmatmul.mubr.f32.gmra.mxu0 %v50
    %v127 = vpop.f32.mrf.mxu0
    %v128 = vadd.f32 0.0, %v127
    %v129 = vpop.f32.mrf.mxu0
    %130 = vmatprep.mubr.f32.mxu0 0.0
    %131 = vmatmul.mubr.f32.gmra.mxu0 %v53
    %v132 = vpop.f32.mrf.mxu0
    %v133 = vadd.f32 0.0, %v132
    %v134 = vpop.f32.mrf.mxu0
    %135 = vmatprep.mubr.f32.mxu0 0.0
    %136 = vmatmul.mubr.f32.gmra.mxu0 %v56
    %v137 = vpop.f32.mrf.mxu0
    %v138 = vadd.f32 0.0, %v137
    %v139 = vpop.f32.mrf.mxu0
    %140 = vmatprep.mubr.f32.mxu0 0.0
    %141 = vmatmul.mubr.f32.gmra.mxu0 %v59
    %v142 = vpop.f32.mrf.mxu0
    %v143 = vadd.f32 0.0, %v142
    %v144 = vpop.f32.mrf.mxu0
    %145 = vdwg.mxu0
    %146 = vst.msk [vmem:[#allocation7] sm:$0xff] %vm48, %v128
    %147 = vst.msk [vmem:[#allocation7 + $0x8] sm:$0xff] %vm48, %v133
    %148 = vst.msk [vmem:[#allocation7 + $0x10] sm:$0xff] %vm48, %v138
    %149 = vst.msk [vmem:[#allocation7 + $0x18] sm:$0xff] %vm48, %v143
    // Predicated region
    $region18: #{tpu_custom_call.1} parent=1 // pred_check
      _
    $region19: #{tpu_custom_call.1} parent=1 // pred_check_branch
      %151 = sbr.rel (0) target = $region21
    $region20: #{tpu_custom_call.1} parent=1 // pred_region
      %s153 = ssub.s32 512, 512
      %154 = vsyncadd [#allocation4], %s153
      %s155 = sshll.u32 [#allocation7], 4
      %s156 = int_to_ptr.vmem [resolvable:$true] %s155
      %161 = dma.vmem_to_hbm [thread:$0]  %s156, 512, %s2, [#allocation4], 128, 128, 8
    $region21: #{tpu_custom_call.1} parent=1 // pred_fallthru
      _
    // Predicated region
    $region22: #{tpu_custom_call.1} parent=1 // pred_check
      _
    $region23: #{tpu_custom_call.1} parent=1 // pred_check_branch
      %163 = sbr.rel (0) target = $region25
    $region24: #{tpu_custom_call.1} parent=1 // pred_region
      %164 = dma.done [#allocation4], 512
    $region25: #{tpu_custom_call.1} parent=1 // pred_fallthru
      _
    %165 = vsyncpa [#allocation3], 1
    %166 = vsyncpa [#allocation6], 1
    %167 = vsyncpa [#allocation4], 1

</llo_original>
